<compile_context>
chip_gen: v6e
topology: v6e:2x2x1
jax: 0.10.0
libtpu: 0.0.40
codegen_flags: <defaults>
</compile_context>

<pallas_src>
import jax
import jax.numpy as jnp
from jax.experimental import pallas as pl
from jax.experimental.pallas import tpu as pltpu


OUT_PAD = 128  # lane-dense output width; only column 0 is meaningful.


def mlp_kernel(x_ref, w1_ref, b1_ref, w2_ref, b2_ref, o_ref):
    # Layer 1 on the MXU (f32 accumulate); bias + ReLU on the VPU.
    h = jnp.dot(x_ref[...], w1_ref[...], preferred_element_type=jnp.float32)
    h = jnp.maximum(h + b1_ref[...], 0.0)
    # Layer 2 on the MXU with a lane-dense (h_pad, 128) weight (cols 1..127 are zero),
    # so the output block is a full 128-wide unmasked store instead of (N, 1) vst.msk.
    o = jnp.dot(h, w2_ref[...], preferred_element_type=jnp.float32)
    # b2 is a scalar living in SMEM.
    o_ref[...] = (o + b2_ref[0, 0]).astype(o_ref.dtype)


def mlp_forward(x, w1, b1, w2, b2, *, tile_n=128):
    """out = relu(x @ w1 + b1) @ w2 + b2   (w1: (d, d'), b1: (d',), w2: (d', 1), b2: (1,))."""
    n, d = x.shape
    d_prime = w1.shape[1]

    h_pad = pl.cdiv(d_prime, 128) * 128        # lane-dense hidden width
    n_pad = pl.cdiv(n, tile_n) * tile_n        # batch padded to a tile multiple

    # Zero padding keeps column 0 of the result exactly equal to the unpadded math:
    # padded hidden units have zero weight+bias (ReLU(0)=0) and zero second-layer rows.
    x_p = jnp.pad(x.astype(jnp.float32), ((0, n_pad - n), (0, 0)))
    w1_p = jnp.pad(w1.astype(jnp.float32), ((0, 0), (0, h_pad - d_prime)))
    b1_p = jnp.pad(b1.astype(jnp.float32).reshape(1, d_prime),
                   ((0, 0), (0, h_pad - d_prime)))
    w2_p = jnp.pad(w2.astype(jnp.float32),
                   ((0, h_pad - d_prime), (0, OUT_PAD - w2.shape[1])))
    b2_p = jnp.reshape(b2, (1, 1)).astype(jnp.float32)

    grid = (n_pad // tile_n,)

    flops = 2 * n_pad * d * h_pad + 2 * n_pad * h_pad * OUT_PAD
    bytes_accessed = 4 * (n_pad * d + d * h_pad + h_pad + h_pad * OUT_PAD + 1
                          + n_pad * OUT_PAD)

    out = pl.pallas_call(
        mlp_kernel,
        out_shape=jax.ShapeDtypeStruct((n_pad, OUT_PAD), jnp.float32),
        grid=grid,
        in_specs=[
            # Streamed operand: (tile_n, d) rows per grid step (d == full array dim).
            pl.BlockSpec((tile_n, d), lambda i: (i, 0)),
            # Grid-invariant params: resident in VMEM for the whole grid.
            pl.BlockSpec((d, h_pad), lambda i: (0, 0)),
            pl.BlockSpec((1, h_pad), lambda i: (0, 0)),
            pl.BlockSpec((h_pad, OUT_PAD), lambda i: (0, 0)),
            # Scalar bias in SMEM.
            pl.BlockSpec(memory_space=pltpu.MemorySpace.SMEM),
        ],
        out_specs=pl.BlockSpec((tile_n, OUT_PAD), lambda i: (i, 0)),
        compiler_params=pltpu.CompilerParams(
            dimension_semantics=("parallel",),        # megacore sharding on v7x
            vmem_limit_bytes=32 * 1024 * 1024,        # safe on v5e / v6e / v7x
        ),
        cost_estimate=pl.CostEstimate(
            flops=flops, transcendentals=0, bytes_accessed=bytes_accessed),
    )(x_p, w1_p, b1_p, w2_p, b2_p)

    # Only the first n rows and column 0 are meaningful.
    return out[:n, :1]


def init_params(key, d, d_prime):
    # Deterministic init mimicking nn.Linear's U(-1/sqrt(fan_in), 1/sqrt(fan_in)).
    k1, k2, k3, k4 = jax.random.split(key, 4)
    bound1 = 1.0 / jnp.sqrt(d)
    bound2 = 1.0 / jnp.sqrt(d_prime)
    # Weights stored already transposed ((in, out)) so the kernel does x @ W directly.
    w1 = jax.random.uniform(k1, (d, d_prime), jnp.float32, -bound1, bound1)
    b1 = jax.random.uniform(k2, (d_prime,), jnp.float32, -bound1, bound1)
    w2 = jax.random.uniform(k3, (d_prime, 1), jnp.float32, -bound2, bound2)
    b2 = jax.random.uniform(k4, (1,), jnp.float32, -bound2, bound2)
    return w1, b1, w2, b2


if __name__ == "__main__":
    d, d_prime = 2, 32
    key = jax.random.PRNGKey(0)
    w1, b1, w2, b2 = init_params(key, d, d_prime)

    # XOR-style inputs from the original script (batch=4).
    x = jnp.array([[0.0, 0.0], [0.0, 1.0], [1.0, 0.0], [1.0, 1.0]], dtype=jnp.float32)
    out = mlp_forward(x, w1, b1, w2, b2)
    jax.block_until_ready(out)

    ref = jnp.maximum(x @ w1 + b1, 0.0) @ w2 + b2
    assert out.shape == (4, 1)
    assert jnp.allclose(out, ref, atol=1e-5, rtol=1e-5)

    # Larger deterministic batch to exercise the multi-tile pipelined grid (grid=(4,)).
    xb = jax.random.uniform(jax.random.PRNGKey(0), (512, d), jnp.float32, -1.0, 1.0)
    out_b = mlp_forward(xb, w1, b1, w2, b2, tile_n=128)
    jax.block_until_ready(out_b)
    ref_b = jnp.maximum(xb @ w1 + b1, 0.0) @ w2 + b2
    assert out_b.shape == (512, 1)
    assert jnp.allclose(out_b, ref_b, atol=1e-4, rtol=1e-4)

    print("KERNEL_OK")
</pallas_src>

<mosaic_0001>
module attributes {stable_mosaic.version = 11 : i64} {
  func.func @mlp_kernel(%arg0: i32, %arg1: memref<128x2xf32, #tpu.memory_space<vmem>>, %arg2: memref<2x128xf32, #tpu.memory_space<vmem>>, %arg3: memref<1x128xf32, #tpu.memory_space<vmem>>, %arg4: memref<128x128xf32, #tpu.memory_space<vmem>>, %arg5: memref<1x1xf32, #tpu.memory_space<smem>>, %arg6: memref<128x128xf32, #tpu.memory_space<vmem>>) attributes {dimension_semantics = [#tpu.dimension_semantics<parallel>], iteration_bounds = array<i64: 1>, scalar_prefetch = 0 : i64, scratch_operands = 0 : i64, tpu.core_type = #tpu.core_type<tc>, window_params = [{transform_indices = @transform_0, window_bounds = array<i64: 128, 2>}, {pipeline_mode = #tpu.pipeline_mode<synchronous>, transform_indices = @transform_1, window_bounds = array<i64: 2, 128>}, {pipeline_mode = #tpu.pipeline_mode<synchronous>, transform_indices = @transform_2, window_bounds = array<i64: 1, 128>}, {pipeline_mode = #tpu.pipeline_mode<synchronous>, transform_indices = @transform_3, window_bounds = array<i64: 128, 128>}, {transform_indices = @transform_4, window_bounds = array<i64: 1, 1>}, {transform_indices = @transform_5, window_bounds = array<i64: 128, 128>}]} {
    %c0 = arith.constant 0 : index
    %c0_0 = arith.constant 0 : index
    %0 = vector.load %arg1[%c0, %c0_0] : memref<128x2xf32, #tpu.memory_space<vmem>>, vector<128x2xf32>
    %c0_1 = arith.constant 0 : index
    %c0_2 = arith.constant 0 : index
    %1 = vector.load %arg2[%c0_1, %c0_2] : memref<2x128xf32, #tpu.memory_space<vmem>>, vector<2x128xf32>
    %cst = arith.constant dense<0.000000e+00> : vector<128x128xf32>
    %2 = tpu.matmul %0, %1, %cst {dimension_numbers = #tpu.dot_dimension_numbers<[1], [0], [0], [1], [0, 0, 1, 1], [], []>} : vector<128x2xf32>, vector<2x128xf32>, vector<128x128xf32> -> vector<128x128xf32>
    %c0_3 = arith.constant 0 : index
    %c0_4 = arith.constant 0 : index
    %3 = vector.load %arg3[%c0_3, %c0_4] : memref<1x128xf32, #tpu.memory_space<vmem>>, vector<1x128xf32>
    %4 = vector.broadcast %3 : vector<1x128xf32> to vector<128x128xf32>
    %5 = arith.addf %2, %4 : vector<128x128xf32>
    %cst_5 = arith.constant 0.000000e+00 : f32
    %6 = vector.broadcast %cst_5 : f32 to vector<128x128xf32>
    %7 = arith.maximumf %5, %6 : vector<128x128xf32>
    %c0_6 = arith.constant 0 : index
    %c0_7 = arith.constant 0 : index
    %8 = vector.load %arg4[%c0_6, %c0_7] : memref<128x128xf32, #tpu.memory_space<vmem>>, vector<128x128xf32>
    %cst_8 = arith.constant dense<0.000000e+00> : vector<128x128xf32>
    %9 = tpu.matmul %7, %8, %cst_8 {dimension_numbers = #tpu.dot_dimension_numbers<[1], [0], [0], [1], [0, 0, 1, 1], [], []>} : vector<128x128xf32>, vector<128x128xf32>, vector<128x128xf32> -> vector<128x128xf32>
    %c0_9 = arith.constant 0 : index
    %c0_10 = arith.constant 0 : index
    %10 = memref.load %arg5[%c0_9, %c0_10] : memref<1x1xf32, #tpu.memory_space<smem>>
    %11 = vector.broadcast %10 : f32 to vector<128x128xf32>
    %12 = arith.addf %9, %11 : vector<128x128xf32>
    %c0_11 = arith.constant 0 : index
    %c0_12 = arith.constant 0 : index
    %13 = vector.load %arg6[%c0_11, %c0_12] : memref<128x128xf32, #tpu.memory_space<vmem>>, vector<128x128xf32>
    tpu.vector_store %arg6[%c0_11, %c0_12], %12 {strides = array<i32>} : memref<128x128xf32, #tpu.memory_space<vmem>>, vector<128x128xf32>,
    return
  }
  func.func @transform_0(%arg0: i32) -> (i32, i32) {
    %c0_i32 = arith.constant 0 : i32
    %c0_i32_0 = arith.constant 0 : i32
    return %arg0, %c0_i32 : i32, i32
  }
  func.func @transform_1(%arg0: i32) -> (i32, i32) {
    %c0_i32 = arith.constant 0 : i32
    %c0_i32_0 = arith.constant 0 : i32
    %c0_i32_1 = arith.constant 0 : i32
    return %c0_i32, %c0_i32_0 : i32, i32
  }
  func.func @transform_2(%arg0: i32) -> (i32, i32) {
    %c0_i32 = arith.constant 0 : i32
    %c0_i32_0 = arith.constant 0 : i32
    %c0_i32_1 = arith.constant 0 : i32
    return %c0_i32, %c0_i32_0 : i32, i32
  }
  func.func @transform_3(%arg0: i32) -> (i32, i32) {
    %c0_i32 = arith.constant 0 : i32
    %c0_i32_0 = arith.constant 0 : i32
    %c0_i32_1 = arith.constant 0 : i32
    return %c0_i32, %c0_i32_0 : i32, i32
  }
  func.func @transform_4(%arg0: i32) -> (i32, i32) {
    %c0_i32 = arith.constant 0 : i32
    %c0_i32_0 = arith.constant 0 : i32
    %c0_i32_1 = arith.constant 0 : i32
    return %c0_i32, %c0_i32_0 : i32, i32
  }
  func.func @transform_5(%arg0: i32) -> (i32, i32) {
    %c0_i32 = arith.constant 0 : i32
    %c0_i32_0 = arith.constant 0 : i32
    return %arg0, %c0_i32 : i32, i32
  }
}

</mosaic_0001>

<llo_original>
// kernel: tpu_custom_call.1
$region0: #{tpu_custom_call.1}
  #allocation0 [shape = 'u32[]', space=smem, size = 0x4, offset = 0x4, fixed_abs, tag = 'smem constant byte address 0x4 - core index']
  #allocation1 [shape = 'u32[144,128]{1,0:T(1,128)}', space=vmem, size = 0x12000, scoped, tag = 'internal scratch']
  #allocation2 [shape = 'f32[1,1]{1,0:T(1,128)S(6)}', space=smem, size = 0x200, scoped, tag = 'scoped memory for tpu_custom_call.1']
  %s0 = inlined_call_operand.vmem [shape: f32[128,2], index: 0, kind: input, shape index: {}]
  %s1 = inlined_call_operand.vmem [shape: f32[2,128], index: 1, kind: input, shape index: {}]
  %s2 = inlined_call_operand.vmem [shape: f32[1,128], index: 2, kind: input, shape index: {}]
  %s3 = inlined_call_operand.vmem [shape: f32[128,128], index: 3, kind: input, shape index: {}]
  %s4 = inlined_call_operand.<no memory space> [shape: f32[1,1], index: 4, kind: input, shape index: {}]
  %s5 = inlined_call_operand.hbm [shape: f32[128,128], index: 5, kind: output, shape index: {}]
  %s6 = sld [smem:[#allocation0]]
  $region30: #{tpu_custom_call.1} parent=0
    _
  %s8 = ssub.s32 1, %s6
  %s9 = scalar_select 0, %s8, %s6
  %10 = sst [smem:[#allocation2]] %s4
  $region1: #{tpu_custom_call.1} parent=0
    #allocation3 [shape = 'u8[65536]{0}', space=vmem, size = 0x10000, scoped, tag = 'output window, operand 0, single buffered']
    #allocation4 [shape = 's32[1]{0}', space=sflag, size = 0x4, scoped, tag = 'scoped memory for tpu_custom_call.1']
    %11 = vsyncpa [#allocation4], 0
    // Predicated region
    $region2: #{tpu_custom_call.1} parent=1 // pred_check
      _
    $region3: #{tpu_custom_call.1} parent=1 // pred_check_branch
      %13 = sbr.rel (0) target = $region5
    $region4: #{tpu_custom_call.1} parent=1 // pred_region
      _
    $region5: #{tpu_custom_call.1} parent=1 // pred_fallthru
      _
    // Predicated region
    $region6: #{tpu_custom_call.1} parent=1 // pred_check
      _
    $region7: #{tpu_custom_call.1} parent=1 // pred_check_branch
      %15 = sbr.rel (0) target = $region9
    $region8: #{tpu_custom_call.1} parent=1 // pred_region
      _
    $region9: #{tpu_custom_call.1} parent=1 // pred_fallthru
      _
    // Predicated region
    $region10: #{tpu_custom_call.1} parent=1 // pred_check
      _
    $region11: #{tpu_custom_call.1} parent=1 // pred_check_branch
      %17 = sbr.rel (0) target = $region13
    $region12: #{tpu_custom_call.1} parent=1 // pred_region
      _
    $region13: #{tpu_custom_call.1} parent=1 // pred_fallthru
      _
    // Predicated region
    $region14: #{tpu_custom_call.1} parent=1 // pred_check
      _
    $region15: #{tpu_custom_call.1} parent=1 // pred_check_branch
      %19 = sbr.rel (0) target = $region17
    $region16: #{tpu_custom_call.1} parent=1 // pred_region
      _
    $region17: #{tpu_custom_call.1} parent=1 // pred_fallthru
      _
    // Predicated region
    $region18: #{tpu_custom_call.1} parent=1 // pred_check
      _
    $region19: #{tpu_custom_call.1} parent=1 // pred_check_branch
      %21 = sbr.rel (0) target = $region21
    $region20: #{tpu_custom_call.1} parent=1 // pred_region
      _
    $region21: #{tpu_custom_call.1} parent=1 // pred_fallthru
      _
    %v22 = vld [vmem:[%s0] sm:$0xff]
    %v23 = vld [vmem:[%s0 + $0x8] sm:$0xff]
    %v24 = vld [vmem:[%s0 + $0x10] sm:$0xff]
    %v25 = vld [vmem:[%s0 + $0x18] sm:$0xff]
    %v26 = vld [vmem:[%s0 + $0x20] sm:$0xff]
    %v27 = vld [vmem:[%s0 + $0x28] sm:$0xff]
    %v28 = vld [vmem:[%s0 + $0x30] sm:$0xff]
    %v29 = vld [vmem:[%s0 + $0x38] sm:$0xff]
    %v30 = vld [vmem:[%s0 + $0x40] sm:$0xff]
    %v31 = vld [vmem:[%s0 + $0x48] sm:$0xff]
    %v32 = vld [vmem:[%s0 + $0x50] sm:$0xff]
    %v33 = vld [vmem:[%s0 + $0x58] sm:$0xff]
    %v34 = vld [vmem:[%s0 + $0x60] sm:$0xff]
    %v35 = vld [vmem:[%s0 + $0x68] sm:$0xff]
    %v36 = vld [vmem:[%s0 + $0x70] sm:$0xff]
    %v37 = vld [vmem:[%s0 + $0x78] sm:$0xff]
    %v38 = vld [vmem:[%s1] sm:$0x3]
    %v39 = vld [vmem:[%s2] sm:$0x1]
    %v41 = vlaneseq
    %v42 = vshrl.u32 %v41, 7
    %v43 = vsub.s32 0, %v42
    %v44 = vrot.slane %v39, %v43
    %vm46 = vcmask 15360
    %v48 = vsel %vm46, %v22, 0
    %v51 = vsel %vm46, %v23, 0
    %v54 = vsel %vm46, %v24, 0
    %v57 = vsel %vm46, %v25, 0
    %v60 = vsel %vm46, %v26, 0
    %v63 = vsel %vm46, %v27, 0
    %v66 = vsel %vm46, %v28, 0
    %v69 = vsel %vm46, %v29, 0
    %v72 = vsel %vm46, %v30, 0
    %v75 = vsel %vm46, %v31, 0
    %v78 = vsel %vm46, %v32, 0
    %v81 = vsel %vm46, %v33, 0
    %v84 = vsel %vm46, %v34, 0
    %v87 = vsel %vm46, %v35, 0
    %v90 = vsel %vm46, %v36, 0
    %v93 = vsel %vm46, %v37, 0
    %vm95 = vcmask 1041408
    %v97 = vsel %vm95, %v38, 0
    %99 = vmatprep.subr.mxu0 0.0
    %100 = vmatpush1.msra.mxu0 0.0
    %101 = vmatprep.subr.mxu0 0.0
    %102 = vmatpush1.msra.mxu0 0.0
    %103 = vmatprep.subr.mxu0 0.0
    %104 = vmatpush1.msra.mxu0 0.0
    %105 = vmatprep.subr.mxu0 0.0
    %106 = vmatpush1.msra.mxu0 0.0
    %107 = vmatprep.subr.mxu0 0.0
    %108 = vmatpush1.msra.mxu0 0.0
    %109 = vmatprep.subr.mxu0 0.0
    %110 = vmatpush1.msra.mxu0 0.0
    %111 = vmatprep.subr.mxu0 0.0
    %112 = vmatpush1.msra.mxu0 0.0
    %113 = vmatprep.subr.mxu0 0.0
    %114 = vmatpush1.msra.mxu0 0.0
    %115 = vmatprep.subr.mxu0 0.0
    %116 = vmatpush1.msra.mxu0 0.0
    %117 = vmatprep.subr.mxu0 0.0
    %118 = vmatpush1.msra.mxu0 0.0
    %119 = vmatprep.subr.mxu0 0.0
    %120 = vmatpush1.msra.mxu0 0.0
    %121 = vmatprep.subr.mxu0 0.0
    %122 = vmatpush1.msra.mxu0 0.0
    %123 = vmatprep.subr.mxu0 0.0
    %124 = vmatpush1.msra.mxu0 0.0
    %125 = vmatprep.subr.mxu0 0.0
    %126 = vmatpush1.msra.mxu0 0.0
    %127 = vmatprep.subr.mxu0 0.0
    %128 = vmatpush1.msra.mxu0 0.0
    %129 = vmatprep.subr.mxu0 0.0
    %130 = vmatpush1.msra.mxu0 %v97
    %131 = vmatprep.subr.mxu0 0.0
    %132 = vmatpush2.msra.mxu0 0.0
    %133 = vmatprep.subr.mxu0 0.0
    %134 = vmatpush2.msra.mxu0 0.0
    %135 = vmatprep.subr.mxu0 0.0
    %136 = vmatpush2.msra.mxu0 0.0
    %137 = vmatprep.subr.mxu0 0.0
    %138 = vmatpush2.msra.mxu0 0.0
    %139 = vmatprep.subr.mxu0 0.0
    %140 = vmatpush2.msra.mxu0 0.0
    %141 = vmatprep.subr.mxu0 0.0
    %142 = vmatpush2.msra.mxu0 0.0
    %143 = vmatprep.subr.mxu0 0.0
    %144 = vmatpush2.msra.mxu0 0.0
    %145 = vmatprep.subr.mxu0 0.0
    %146 = vmatpush2.msra.mxu0 0.0
    %147 = vmatprep.subr.mxu0 0.0
    %148 = vmatpush2.msra.mxu0 0.0
    %149 = vmatprep.subr.mxu0 0.0
    %150 = vmatpush2.msra.mxu0 0.0
    %151 = vmatprep.subr.mxu0 0.0
    %152 = vmatpush2.msra.mxu0 0.0
    %153 = vmatprep.subr.mxu0 0.0
    %154 = vmatpush2.msra.mxu0 0.0
    %155 = vmatprep.subr.mxu0 0.0
    %156 = vmatpush2.msra.mxu0 0.0
    %157 = vmatprep.subr.mxu0 0.0
    %158 = vmatpush2.msra.mxu0 0.0
    %159 = vmatprep.subr.mxu0 0.0
    %160 = vmatpush2.msra.mxu0 0.0
    %161 = vmatprep.subr.mxu0 0.0
    %162 = vmatpush2.msra.mxu0 0.0
    %163 = vmatprep.mubr.f32.mxu0 0.0
    %164 = vmatmul.mubr.f32.gmra.mxu0 %v48
    %v165 = vpop.f32.mrf.mxu0
    %v166 = vadd.f32 %v44, %v165
    %v167 = vpop.f32.mrf.mxu0
    %168 = vmatprep.mubr.f32.mxu0 0.0
    %169 = vmatmul.mubr.f32.gmra.mxu0 %v51
    %v170 = vpop.f32.mrf.mxu0
    %v171 = vadd.f32 %v44, %v170
    %v172 = vpop.f32.mrf.mxu0
    %173 = vmatprep.mubr.f32.mxu0 0.0
    %174 = vmatmul.mubr.f32.gmra.mxu0 %v54
    %v175 = vpop.f32.mrf.mxu0
    %v176 = vadd.f32 %v44, %v175
    %v177 = vpop.f32.mrf.mxu0
    %178 = vmatprep.mubr.f32.mxu0 0.0
    %179 = vmatmul.mubr.f32.gmra.mxu0 %v57
    %v180 = vpop.f32.mrf.mxu0
    %v181 = vadd.f32 %v44, %v180
    %v182 = vpop.f32.mrf.mxu0
    %183 = vmatprep.mubr.f32.mxu0 0.0
    %184 = vmatmul.mubr.f32.gmra.mxu0 %v60
    %v185 = vpop.f32.mrf.mxu0
    %v186 = vadd.f32 %v44, %v185
    %v187 = vpop.f32.mrf.mxu0
    %188 = vmatprep.mubr.f32.mxu0 0.0
    %189 = vmatmul.mubr.f32.gmra.mxu0 %v63
    %v190 = vpop.f32.mrf.mxu0
    %v191 = vadd.f32 %v44, %v190
    %v192 = vpop.f32.mrf.mxu0
    %193 = vmatprep.mubr.f32.mxu0 0.0
    %194 = vmatmul.mubr.f32.gmra.mxu0 %v66
    %v195 = vpop.f32.mrf.mxu0
    %v196 = vadd.f32 %v44, %v195
    %v197 = vpop.f32.mrf.mxu0
    %198 = vmatprep.mubr.f32.mxu0 0.0
    %199 = vmatmul.mubr.f32.gmra.mxu0 %v69
    %v200 = vpop.f32.mrf.mxu0
    %v201 = vadd.f32 %v44, %v200
    %v202 = vpop.f32.mrf.mxu0
    %203 = vmatprep.mubr.f32.mxu0 0.0
    %204 = vmatmul.mubr.f32.gmra.mxu0 %v72
    %v205 = vpop.f32.mrf.mxu0
    %v206 = vadd.f32 %v44, %v205
    %v207 = vpop.f32.mrf.mxu0
    %208 = vmatprep.mubr.f32.mxu0 0.0
    %209 = vmatmul.mubr.f32.gmra.mxu0 %v75
    %v210 = vpop.f32.mrf.mxu0
    %v211 = vadd.f32 %v44, %v210
    %v212 = vpop.f32.mrf.mxu0
    %213 = vmatprep.mubr.f32.mxu0 0.0
    %214 = vmatmul.mubr.f32.gmra.mxu0 %v78
    %v215 = vpop.f32.mrf.mxu0
    %v216 = vadd.f32 %v44, %v215
    %v217 = vpop.f32.mrf.mxu0
    %218 = vmatprep.mubr.f32.mxu0 0.0
    %219 = vmatmul.mubr.f32.gmra.mxu0 %v81
    %v220 = vpop.f32.mrf.mxu0
    %v221 = vadd.f32 %v44, %v220
    %v222 = vpop.f32.mrf.mxu0
    %223 = vmatprep.mubr.f32.mxu0 0.0
    %224 = vmatmul.mubr.f32.gmra.mxu0 %v84
    %v225 = vpop.f32.mrf.mxu0
    %v226 = vadd.f32 %v44, %v225
    %v227 = vpop.f32.mrf.mxu0
    %228 = vmatprep.mubr.f32.mxu0 0.0
    %229 = vmatmul.mubr.f32.gmra.mxu0 %v87
    %v230 = vpop.f32.mrf.mxu0
    %v231 = vadd.f32 %v44, %v230
    %v232 = vpop.f32.mrf.mxu0
    %233 = vmatprep.mubr.f32.mxu0 0.0
    %234 = vmatmul.mubr.f32.gmra.mxu0 %v90
    %v235 = vpop.f32.mrf.mxu0
    %v236 = vadd.f32 %v44, %v235
    %v237 = vpop.f32.mrf.mxu0
    %238 = vmatprep.mubr.f32.mxu0 0.0
    %239 = vmatmul.mubr.f32.gmra.mxu0 %v93
    %v240 = vpop.f32.mrf.mxu0
    %v241 = vadd.f32 %v44, %v240
    %v242 = vpop.f32.mrf.mxu0
    %243 = vdwg.mxu0
    %v244 = vmax.f32 %v166, 0.0
    %v245 = vmax.f32 %v171, 0.0
    %v246 = vmax.f32 %v176, 0.0
    %v247 = vmax.f32 %v181, 0.0
    %v248 = vmax.f32 %v186, 0.0
    %v249 = vmax.f32 %v191, 0.0
    %v250 = vmax.f32 %v196, 0.0
    %v251 = vmax.f32 %v201, 0.0
    %v252 = vmax.f32 %v206, 0.0
    %v253 = vmax.f32 %v211, 0.0
    %v254 = vmax.f32 %v216, 0.0
    %v255 = vmax.f32 %v221, 0.0
    %v256 = vmax.f32 %v226, 0.0
    %v257 = vmax.f32 %v231, 0.0
    %v258 = vmax.f32 %v236, 0.0
    %v259 = vmax.f32 %v241, 0.0
    %v260 = vld [vmem:[%s3] sm:$0xff]
    %v261 = vld [vmem:[%s3 + $0x8] sm:$0xff]
    %v262 = vld [vmem:[%s3 + $0x10] sm:$0xff]
    %v263 = vld [vmem:[%s3 + $0x18] sm:$0xff]
    %v264 = vld [vmem:[%s3 + $0x20] sm:$0xff]
    %v265 = vld [vmem:[%s3 + $0x28] sm:$0xff]
    %v266 = vld [vmem:[%s3 + $0x30] sm:$0xff]
    %v267 = vld [vmem:[%s3 + $0x38] sm:$0xff]
    %v268 = vld [vmem:[%s3 + $0x40] sm:$0xff]
    %v269 = vld [vmem:[%s3 + $0x48] sm:$0xff]
    %v270 = vld [vmem:[%s3 + $0x50] sm:$0xff]
    %v271 = vld [vmem:[%s3 + $0x58] sm:$0xff]
    %v272 = vld [vmem:[%s3 + $0x60] sm:$0xff]
    %v273 = vld [vmem:[%s3 + $0x68] sm:$0xff]
    %v274 = vld [vmem:[%s3 + $0x70] sm:$0xff]
    %v275 = vld [vmem:[%s3 + $0x78] sm:$0xff]
    %s276 = sld [smem:[#allocation2]]
    %v277 = vstv %s276
    %278 = vmatprep.subr.mxu0 0.0
    %279 = vmatpush1.msra.mxu0 %v275
    %280 = vmatprep.subr.mxu0 0.0
    %281 = vmatpush1.msra.mxu0 %v274
    %282 = vmatprep.subr.mxu0 0.0
    %283 = vmatpush1.msra.mxu0 %v273
    %284 = vmatprep.subr.mxu0 0.0
    %285 = vmatpush1.msra.mxu0 %v272
    %286 = vmatprep.subr.mxu0 0.0
    %287 = vmatpush1.msra.mxu0 %v271
    %288 = vmatprep.subr.mxu0 0.0
    %289 = vmatpush1.msra.mxu0 %v270
    %290 = vmatprep.subr.mxu0 0.0
    %291 = vmatpush1.msra.mxu0 %v269
    %292 = vmatprep.subr.mxu0 0.0
    %293 = vmatpush1.msra.mxu0 %v268
    %294 = vmatprep.subr.mxu0 0.0
    %295 = vmatpush1.msra.mxu0 %v267
    %296 = vmatprep.subr.mxu0 0.0
    %297 = vmatpush1.msra.mxu0 %v266
    %298 = vmatprep.subr.mxu0 0.0
    %299 = vmatpush1.msra.mxu0 %v265
    %300 = vmatprep.subr.mxu0 0.0
    %301 = vmatpush1.msra.mxu0 %v264
    %302 = vmatprep.subr.mxu0 0.0
    %303 = vmatpush1.msra.mxu0 %v263
    %304 = vmatprep.subr.mxu0 0.0
    %305 = vmatpush1.msra.mxu0 %v262
    %306 = vmatprep.subr.mxu0 0.0
    %307 = vmatpush1.msra.mxu0 %v261
    %308 = vmatprep.subr.mxu0 0.0
    %309 = vmatpush1.msra.mxu0 %v260
    %310 = vmatprep.subr.mxu0 0.0
    %311 = vmatpush2.msra.mxu0 0.0
    %312 = vmatprep.subr.mxu0 0.0
    %313 = vmatpush2.msra.mxu0 0.0
    %314 = vmatprep.subr.mxu0 0.0
    %315 = vmatpush2.msra.mxu0 0.0
    %316 = vmatprep.subr.mxu0 0.0
    %317 = vmatpush2.msra.mxu0 0.0
    %318 = vmatprep.subr.mxu0 0.0
    %319 = vmatpush2.msra.mxu0 0.0
    %320 = vmatprep.subr.mxu0 0.0
    %321 = vmatpush2.msra.mxu0 0.0
    %322 = vmatprep.subr.mxu0 0.0
    %323 = vmatpush2.msra.mxu0 0.0
    %324 = vmatprep.subr.mxu0 0.0
    %325 = vmatpush2.msra.mxu0 0.0
    %326 = vmatprep.subr.mxu0 0.0
    %327 = vmatpush2.msra.mxu0 0.0
    %328 = vmatprep.subr.mxu0 0.0
    %329 = vmatpush2.msra.mxu0 0.0
    %330 = vmatprep.subr.mxu0 0.0
    %331 = vmatpush2.msra.mxu0 0.0
    %332 = vmatprep.subr.mxu0 0.0
    %333 = vmatpush2.msra.mxu0 0.0
    %334 = vmatprep.subr.mxu0 0.0
    %335 = vmatpush2.msra.mxu0 0.0
    %336 = vmatprep.subr.mxu0 0.0
    %337 = vmatpush2.msra.mxu0 0.0
    %338 = vmatprep.subr.mxu0 0.0
    %339 = vmatpush2.msra.mxu0 0.0
    %340 = vmatprep.subr.mxu0 0.0
    %341 = vmatpush2.msra.mxu0 0.0
    %342 = vmatprep.mubr.f32.mxu0 0.0
    %343 = vmatmul.mubr.f32.gmra.mxu0 %v244
    %v344 = vpop.f32.mrf.mxu0
    %v345 = vadd.f32 %v277, %v344
    %v346 = vpop.f32.mrf.mxu0
    %347 = vmatprep.mubr.f32.mxu0 0.0
    %348 = vmatmul.mubr.f32.gmra.mxu0 %v245
    %v349 = vpop.f32.mrf.mxu0
    %v350 = vadd.f32 %v277, %v349
    %v351 = vpop.f32.mrf.mxu0
    %352 = vmatprep.mubr.f32.mxu0 0.0
    %353 = vmatmul.mubr.f32.gmra.mxu0 %v246
    %v354 = vpop.f32.mrf.mxu0
    %v355 = vadd.f32 %v277, %v354
    %v356 = vpop.f32.mrf.mxu0
    %357 = vmatprep.mubr.f32.mxu0 0.0
    %358 = vmatmul.mubr.f32.gmra.mxu0 %v247
    %v359 = vpop.f32.mrf.mxu0
    %v360 = vadd.f32 %v277, %v359
    %v361 = vpop.f32.mrf.mxu0
    %362 = vmatprep.mubr.f32.mxu0 0.0
    %363 = vmatmul.mubr.f32.gmra.mxu0 %v248
    %v364 = vpop.f32.mrf.mxu0
    %v365 = vadd.f32 %v277, %v364
    %v366 = vpop.f32.mrf.mxu0
    %367 = vmatprep.mubr.f32.mxu0 0.0
    %368 = vmatmul.mubr.f32.gmra.mxu0 %v249
    %v369 = vpop.f32.mrf.mxu0
    %v370 = vadd.f32 %v277, %v369
    %v371 = vpop.f32.mrf.mxu0
    %372 = vmatprep.mubr.f32.mxu0 0.0
    %373 = vmatmul.mubr.f32.gmra.mxu0 %v250
    %v374 = vpop.f32.mrf.mxu0
    %v375 = vadd.f32 %v277, %v374
    %v376 = vpop.f32.mrf.mxu0
    %377 = vmatprep.mubr.f32.mxu0 0.0
    %378 = vmatmul.mubr.f32.gmra.mxu0 %v251
    %v379 = vpop.f32.mrf.mxu0
    %v380 = vadd.f32 %v277, %v379
    %v381 = vpop.f32.mrf.mxu0
    %382 = vmatprep.mubr.f32.mxu0 0.0
    %383 = vmatmul.mubr.f32.gmra.mxu0 %v252
    %v384 = vpop.f32.mrf.mxu0
    %v385 = vadd.f32 %v277, %v384
    %v386 = vpop.f32.mrf.mxu0
    %387 = vmatprep.mubr.f32.mxu0 0.0
    %388 = vmatmul.mubr.f32.gmra.mxu0 %v253
    %v389 = vpop.f32.mrf.mxu0
    %v390 = vadd.f32 %v277, %v389
    %v391 = vpop.f32.mrf.mxu0
    %392 = vmatprep.mubr.f32.mxu0 0.0
    %393 = vmatmul.mubr.f32.gmra.mxu0 %v254
    %v394 = vpop.f32.mrf.mxu0
    %v395 = vadd.f32 %v277, %v394
    %v396 = vpop.f32.mrf.mxu0
    %397 = vmatprep.mubr.f32.mxu0 0.0
    %398 = vmatmul.mubr.f32.gmra.mxu0 %v255
    %v399 = vpop.f32.mrf.mxu0
    %v400 = vadd.f32 %v277, %v399
    %v401 = vpop.f32.mrf.mxu0
    %402 = vmatprep.mubr.f32.mxu0 0.0
    %403 = vmatmul.mubr.f32.gmra.mxu0 %v256
    %v404 = vpop.f32.mrf.mxu0
    %v405 = vadd.f32 %v277, %v404
    %v406 = vpop.f32.mrf.mxu0
    %407 = vmatprep.mubr.f32.mxu0 0.0
    %408 = vmatmul.mubr.f32.gmra.mxu0 %v257
    %v409 = vpop.f32.mrf.mxu0
    %v410 = vadd.f32 %v277, %v409
    %v411 = vpop.f32.mrf.mxu0
    %412 = vmatprep.mubr.f32.mxu0 0.0
    %413 = vmatmul.mubr.f32.gmra.mxu0 %v258
    %v414 = vpop.f32.mrf.mxu0
    %v415 = vadd.f32 %v277, %v414
    %v416 = vpop.f32.mrf.mxu0
    %417 = vmatprep.mubr.f32.mxu0 0.0
    %418 = vmatmul.mubr.f32.gmra.mxu0 %v259
    %v419 = vpop.f32.mrf.mxu0
    %v420 = vadd.f32 %v277, %v419
    %v421 = vpop.f32.mrf.mxu0
    %422 = vdwg.mxu0
    %423 = vst [vmem:[#allocation3] sm:$0xff] %v345
    %424 = vst [vmem:[#allocation3 + $0x8] sm:$0xff] %v350
    %425 = vst [vmem:[#allocation3 + $0x10] sm:$0xff] %v355
    %426 = vst [vmem:[#allocation3 + $0x18] sm:$0xff] %v360
    %427 = vst [vmem:[#allocation3 + $0x20] sm:$0xff] %v365
    %428 = vst [vmem:[#allocation3 + $0x28] sm:$0xff] %v370
    %429 = vst [vmem:[#allocation3 + $0x30] sm:$0xff] %v375
    %430 = vst [vmem:[#allocation3 + $0x38] sm:$0xff] %v380
    %431 = vst [vmem:[#allocation3 + $0x40] sm:$0xff] %v385
    %432 = vst [vmem:[#allocation3 + $0x48] sm:$0xff] %v390
    %433 = vst [vmem:[#allocation3 + $0x50] sm:$0xff] %v395
    %434 = vst [vmem:[#allocation3 + $0x58] sm:$0xff] %v400
    %435 = vst [vmem:[#allocation3 + $0x60] sm:$0xff] %v405
    %436 = vst [vmem:[#allocation3 + $0x68] sm:$0xff] %v410
    %437 = vst [vmem:[#allocation3 + $0x70] sm:$0xff] %v415
    %438 = vst [vmem:[#allocation3 + $0x78] sm:$0xff] %v420
    // Predicated region
    $region22: #{tpu_custom_call.1} parent=1 // pred_check
      _
    $region23: #{tpu_custom_call.1} parent=1 // pred_check_branch
      %440 = sbr.rel (0) target = $region25
    $region24: #{tpu_custom_call.1} parent=1 // pred_region
      %s442 = ssub.s32 2048, 2048
      %443 = vsyncadd [#allocation4], %s442
      %s444 = sshll.u32 [#allocation3], 4
      %s445 = int_to_ptr.vmem [resolvable:$true] %s444
      %450 = dma.vmem_to_hbm [thread:$0]  %s445, 2048, %s5, [#allocation4], 128, 128, 8
    $region25: #{tpu_custom_call.1} parent=1 // pred_fallthru
      _
    // Predicated region
    $region26: #{tpu_custom_call.1} parent=1 // pred_check
      _
    $region27: #{tpu_custom_call.1} parent=1 // pred_check_branch
      %452 = sbr.rel (0) target = $region29
    $region28: #{tpu_custom_call.1} parent=1 // pred_region
      %453 = dma.done [#allocation4], 2048
    $region29: #{tpu_custom_call.1} parent=1 // pred_fallthru
      _
    %454 = vsyncpa [#allocation4], 1

</llo_original>
